<compile_context>
chip_gen: v5e
topology: v5e:2x2
jax: 0.10.0
libtpu: 0.0.40
codegen_flags: <defaults>
</compile_context>

<pallas_src>
import math
from functools import partial

import jax
import jax.numpy as jnp
from jax.experimental import pallas as pl
from jax.experimental.pallas import tpu as pltpu


# ----------------------------------------------------------------------------- utils
def _ru(n, m):
    return ((n + m - 1) // m) * m


def gelu(x):
    # nn.GELU() default in PyTorch is the exact (erf) formulation.
    return jax.nn.gelu(x, approximate=False)


_TINY_WORK = 1 << 16  # below this many MACs, a Pallas launch costs more than XLA


# ----------------------------------------------------------------------------- Pallas: fused conv GEMM (tap-stacked im2col, bias / residual in epilogue)
def _conv_tap_kernel(a_ref, b_ref, bias_ref, *rest, res):
    if res:
        r_ref, o_ref, acc_ref = rest
    else:
        o_ref, acc_ref = rest

    @pl.when(pl.program_id(2) == 0)
    def _():
        acc_ref[...] = jnp.zeros_like(acc_ref)

    acc_ref[...] += jnp.dot(a_ref[0], b_ref[0], preferred_element_type=jnp.float32)

    @pl.when(pl.program_id(2) == pl.num_programs(2) - 1)
    def _():
        out = acc_ref[...] + bias_ref[...]
        if res:
            out = out + r_ref[...]
        o_ref[...] = out.astype(o_ref.dtype)


def _conv_small_kernel(a_ref, b_ref, bias_ref, *rest, res, T):
    if res:
        r_ref, o_ref = rest
    else:
        (o_ref,) = rest
    acc = jnp.zeros(o_ref.shape, jnp.float32)
    for t in range(T):
        acc = acc + jnp.dot(a_ref[t], b_ref[t], preferred_element_type=jnp.float32)
    acc = acc + bias_ref[...]
    if res:
        acc = acc + r_ref[...]
    o_ref[...] = acc.astype(o_ref.dtype)


def _conv_gemm(lhs, wmat, bias, residual, out_dtype):
    """lhs: (T, M, K) tap-stacked patches; wmat: (T, K, N) -> (M, N).
    bf16 MXU inputs, f32 accumulate, bias/residual fused into the epilogue."""
    T, M, K = lhs.shape
    N = wmat.shape[2]
    bias_f = None if bias is None else bias.astype(jnp.float32)

    if M < 8 or K < 8 or T * M * N * K < _TINY_WORK:
        out = jnp.einsum("tmk,tkn->mn", lhs.astype(jnp.float32),
                         wmat.astype(jnp.float32))
        if bias_f is not None:
            out = out + bias_f
        if residual is not None:
            out = out + residual
        return out.astype(out_dtype)

    tm = min(256, _ru(M, 8))
    Mp = _ru(M, tm)
    if N <= 256:
        tn, Np = N, N                 # full-N block: no N padding / slice copies
    else:
        tn = 256 if N % 256 == 0 else 128
        Np = _ru(N, tn)

    lhs_p = lhs.astype(jnp.bfloat16)
    if Mp != M:
        lhs_p = jnp.pad(lhs_p, ((0, 0), (0, Mp - M), (0, 0)))
    w_p = wmat.astype(jnp.bfloat16)
    if Np != N:
        w_p = jnp.pad(w_p, ((0, 0), (0, 0), (0, Np - N)))
    if bias_f is None:
        bias_p = jnp.zeros((1, Np), jnp.float32)
    else:
        bias_p = (jnp.pad(bias_f, (0, Np - N)) if Np != N else bias_f).reshape(1, Np)
    res = residual is not None
    if res:
        res_p = residual.astype(jnp.float32)
        if Mp != M or Np != N:
            res_p = jnp.pad(res_p, ((0, Mp - M), (0, Np - N)))

    if M <= 64:
        # Tiny M: fold every tap into one block -> single launch, no scratch.
        in_specs = [
            pl.BlockSpec((T, Mp, K), lambda i: (0, 0, 0)),
            pl.BlockSpec((T, K, Np), lambda i: (0, 0, 0)),
            pl.BlockSpec((1, Np), lambda i: (0, 0)),
        ]
        args = [lhs_p, w_p, bias_p]
        if res:
            in_specs.append(pl.BlockSpec((Mp, Np), lambda i: (0, 0)))
            args.append(res_p)
        out = pl.pallas_call(
            partial(_conv_small_kernel, res=res, T=T),
            out_shape=jax.ShapeDtypeStruct((Mp, Np), out_dtype),
            grid_spec=pltpu.PrefetchScalarGridSpec(
                num_scalar_prefetch=0,
                grid=(1,),
                in_specs=in_specs,
                out_specs=pl.BlockSpec((Mp, Np), lambda i: (0, 0)),
            ),
            compiler_params=pltpu.CompilerParams(
                dimension_semantics=("arbitrary",)),
        )(*args)
    else:
        # Taps (and only taps) form the reduction grid axis; K is never tiled.
        in_specs = [
            pl.BlockSpec((1, tm, K), lambda i, j, t: (t, i, 0)),
            pl.BlockSpec((1, K, tn), lambda i, j, t: (t, 0, j)),
            pl.BlockSpec((1, tn), lambda i, j, t: (0, j)),
        ]
        args = [lhs_p, w_p, bias_p]
        if res:
            in_specs.append(pl.BlockSpec((tm, tn), lambda i, j, t: (i, j)))
            args.append(res_p)
        out = pl.pallas_call(
            partial(_conv_tap_kernel, res=res),
            out_shape=jax.ShapeDtypeStruct((Mp, Np), out_dtype),
            grid_spec=pltpu.PrefetchScalarGridSpec(
                num_scalar_prefetch=0,
                grid=(Mp // tm, Np // tn, T),
                in_specs=in_specs,
                out_specs=pl.BlockSpec((tm, tn), lambda i, j, t: (i, j)),
                scratch_shapes=[pltpu.VMEM((tm, tn), jnp.float32)],
            ),
            compiler_params=pltpu.CompilerParams(
                dimension_semantics=("parallel", "parallel", "arbitrary")),
        )(*args)

    if Mp != M or Np != N:
        out = out[:M, :N]
    return out


def conv2d(x_nhwc, w_hwio, bias=None, stride=1, padding=0,
           out_dtype=jnp.float32, residual=None):
    B, H, W, C = x_nhwc.shape
    kh, kw, _, Cout = w_hwio.shape
    Ho = (H + 2 * padding - kh) // stride + 1
    Wo = (W + 2 * padding - kw) // stride + 1
    res_flat = None if residual is None else residual.reshape(B * Ho * Wo, Cout)

    if kh == 1 and kw == 1 and stride == 1 and padding == 0:
        lhs = x_nhwc.reshape(1, B * H * W, C)
        out = _conv_gemm(lhs, w_hwio.reshape(1, C, Cout), bias, res_flat, out_dtype)
        return out.reshape(B, H, W, Cout)

    xb = x_nhwc.astype(jnp.bfloat16)          # bf16 BEFORE building shifted views
    if padding > 0:
        xb = jnp.pad(xb, ((0, 0), (padding, padding), (padding, padding), (0, 0)))
    # TODO(synk): kh*kw shifted bf16 views are still materialized in HBM here.
    views = []
    for di in range(kh):
        for dj in range(kw):
            views.append(xb[:, di:di + stride * (Ho - 1) + 1:stride,
                               dj:dj + stride * (Wo - 1) + 1:stride, :])
    lhs = jnp.stack(views, 0).reshape(kh * kw, B * Ho * Wo, C)
    wmat = w_hwio.reshape(kh * kw, C, Cout)
    out = _conv_gemm(lhs, wmat, bias, res_flat, out_dtype)
    return out.reshape(B, Ho, Wo, Cout)


# ----------------------------------------------------------------------------- Pallas: batched matmul (attention), several heads per grid step
def _bmm_kernel(a_ref, b_ref, bias_ref, o_ref, *, gb):
    bias = bias_ref[...]
    for g in range(gb):
        o_ref[g] = (jnp.dot(a_ref[g], b_ref[g], preferred_element_type=jnp.float32)
                    + bias).astype(o_ref.dtype)


def pallas_bmm(a, b, bias=None, out_dtype=jnp.float32):
    """a: (G, M, K), b: (G, K, N) -> (G, M, N).  bf16 MXU inputs, f32 accumulate."""
    G, M, K = a.shape
    N = b.shape[2]
    if M < 8 or G * M * N * K < _TINY_WORK:
        out = jnp.matmul(a.astype(jnp.float32), b.astype(jnp.float32))
        if bias is not None:
            out = out + bias.astype(jnp.float32)
        return out.astype(out_dtype)

    tm = min(256, _ru(M, 8))
    Mp = _ru(M, tm)
    if N <= 512:
        tn, Np = N, N
    else:
        tn = 128
        Np = _ru(N, 128)
    if G >= 2 and M <= 64 and N <= 512:        # tiny per-head tiles: batch heads
        gb = 4 if G % 4 == 0 else (2 if G % 2 == 0 else 1)
    else:
        gb = 1

    a_p = a.astype(jnp.bfloat16)
    b_p = b.astype(jnp.bfloat16)
    if Mp != M:
        a_p = jnp.pad(a_p, ((0, 0), (0, Mp - M), (0, 0)))
    if Np != N:
        b_p = jnp.pad(b_p, ((0, 0), (0, 0), (0, Np - N)))
    if bias is None:
        bias_p = jnp.zeros((1, Np), jnp.float32)
    else:
        bf = bias.astype(jnp.float32)
        bias_p = (jnp.pad(bf, (0, Np - N)) if Np != N else bf).reshape(1, Np)

    out = pl.pallas_call(
        partial(_bmm_kernel, gb=gb),
        out_shape=jax.ShapeDtypeStruct((G, Mp, Np), out_dtype),
        grid_spec=pltpu.PrefetchScalarGridSpec(
            num_scalar_prefetch=0,
            grid=(G // gb, Mp // tm, Np // tn),
            in_specs=[
                pl.BlockSpec((gb, tm, K), lambda g, i, j: (g, i, 0)),
                pl.BlockSpec((gb, K, tn), lambda g, i, j: (g, 0, j)),
                pl.BlockSpec((1, tn), lambda g, i, j: (0, j)),
            ],
            out_specs=pl.BlockSpec((gb, tm, tn), lambda g, i, j: (g, i, j)),
        ),
        compiler_params=pltpu.CompilerParams(
            dimension_semantics=("parallel", "parallel", "parallel")),
    )(a_p, b_p, bias_p)
    if Mp != M or Np != N:
        out = out[:, :M, :N]
    return out


# ----------------------------------------------------------------------------- Pallas: GroupNorm(num_groups=1), lane-dense (no channel padding)
def _gn_kernel(x_ref, g_ref, b_ref, o_ref, *, count, npad, eps):
    x = x_ref[0]                                   # (R, 128); padding is zeros
    mean = jnp.sum(x) * (1.0 / count)
    d = x - mean
    # mean-shifted variance; exact correction for the zero padding (npad elems)
    var = (jnp.sum(d * d) - npad * mean * mean) * (1.0 / count)
    inv = jax.lax.rsqrt(var + eps)
    o_ref[0] = (d * inv * g_ref[0] + b_ref[0]).astype(o_ref.dtype)


def pallas_groupnorm(x_nhwc, gamma, beta, eps=1e-5, out_dtype=jnp.float32):
    B, H, W, C = x_nhwc.shape
    L = H * W
    n = L * C
    n_p = _ru(n, 128)
    R = n_p // 128

    xf = x_nhwc.reshape(B, n).astype(jnp.float32)
    gt = jnp.tile(gamma.astype(jnp.float32), L)
    bt = jnp.tile(beta.astype(jnp.float32), L)
    if n_p != n:
        xf = jnp.pad(xf, ((0, 0), (0, n_p - n)))
        gt = jnp.pad(gt, (0, n_p - n))
        bt = jnp.pad(bt, (0, n_p - n))
    xr = xf.reshape(B, R, 128)
    gt = gt.reshape(1, R, 128)
    bt = bt.reshape(1, R, 128)

    out = pl.pallas_call(
        partial(_gn_kernel, count=float(n), npad=float(n_p - n), eps=eps),
        out_shape=jax.ShapeDtypeStruct((B, R, 128), out_dtype),
        grid_spec=pltpu.PrefetchScalarGridSpec(
            num_scalar_prefetch=0,
            grid=(B,),
            in_specs=[
                pl.BlockSpec((1, R, 128), lambda b: (b, 0, 0)),
                pl.BlockSpec((1, R, 128), lambda b: (0, 0, 0)),
                pl.BlockSpec((1, R, 128), lambda b: (0, 0, 0)),
            ],
            out_specs=pl.BlockSpec((1, R, 128), lambda b: (b, 0, 0)),
        ),
        compiler_params=pltpu.CompilerParams(dimension_semantics=("parallel",)),
    )(xr, gt, bt)
    out = out.reshape(B, n_p)
    if n_p != n:
        out = out[:, :n]
    return out.reshape(B, H, W, C)


# ----------------------------------------------------------------------------- Pallas: depthwise 7x7 conv (single padded copy, row-wise vreg accumulation)
def _dw_kernel(x_ref, w_ref, b_ref, o_ref, *, H, W, C):
    wv = w_ref[...]                                 # (7, 7, C)
    bv = b_ref[0]                                   # (1, C) -- bias + time cond

    def row(y, carry):
        acc = jnp.zeros((1, W, C), jnp.float32)
        for di in range(7):
            for dj in range(7):
                tap = x_ref[0, pl.ds(y + di, 1), dj:dj + W, :]      # (1, W, C)
                acc = acc + tap * wv[di, dj].reshape(1, 1, C)
        o_ref[0, pl.ds(y, 1)] = acc + bv
        return carry

    jax.lax.fori_loop(0, H, row, 0)


def pallas_depthwise7(x_nhwc, w_kkc, bias, cond=None):
    """Depthwise 7x7 (groups=C, padding=3).  The per-(batch,channel) time
    conditioning add is fused into the bias."""
    B, H, W, C = x_nhwc.shape
    xp = jnp.pad(x_nhwc.astype(jnp.float32), ((0, 0), (3, 3), (3, 3), (0, 0)))
    badd = jnp.broadcast_to(bias.astype(jnp.float32)[None, :], (B, C))
    if cond is not None:
        badd = badd + cond.astype(jnp.float32)
    badd = badd.reshape(B, 1, C)
    return pl.pallas_call(
        partial(_dw_kernel, H=H, W=W, C=C),
        out_shape=jax.ShapeDtypeStruct((B, H, W, C), jnp.float32),
        grid_spec=pltpu.PrefetchScalarGridSpec(
            num_scalar_prefetch=0,
            grid=(B,),
            in_specs=[
                pl.BlockSpec((1, H + 6, W + 6, C), lambda b: (b, 0, 0, 0)),
                pl.BlockSpec((7, 7, C), lambda b: (0, 0, 0)),
                pl.BlockSpec((1, 1, C), lambda b: (b, 0, 0)),
            ],
            out_specs=pl.BlockSpec((1, H, W, C), lambda b: (b, 0, 0, 0)),
        ),
        compiler_params=pltpu.CompilerParams(dimension_semantics=("parallel",)),
    )(xp, w_kkc.astype(jnp.float32), badd)


# ----------------------------------------------------------------------------- ConvTranspose2d(C, C, 4, stride=2, padding=1) via subpixel 3x3 conv
def conv_transpose_4_2_1(x_nhwc, w_hwio, bias):
    """Subpixel decomposition of torch's ConvTranspose2d(4, stride=2, padding=1):
    y[2m]   = x[m]*w[1] + x[m-1]*w[3]
    y[2m+1] = x[m]*w[2] + x[m+1]*w[0]       (per spatial dim)."""
    B, H, W, C = x_nhwc.shape
    w = w_hwio.astype(jnp.float32)                  # (4, 4, Cin, Cout)
    Cout = w.shape[3]
    # (conv tap r -> input offset r-1, transposed-conv kernel tap a)
    taps = {0: ((0, 3), (1, 1)), 1: ((1, 2), (2, 0))}
    Wc = jnp.zeros((3, 3, C, 4, Cout), jnp.float32)
    for eh in (0, 1):
        for ew in (0, 1):
            g = 2 * eh + ew
            for (r, a) in taps[eh]:
                for (s, b) in taps[ew]:
                    Wc = Wc.at[r, s, :, g, :].set(w[a, b])
    Wc = Wc.reshape(3, 3, C, 4 * Cout)
    bias4 = jnp.tile(bias.astype(jnp.float32), 4)   # channel layout (g, c)
    y = conv2d(x_nhwc, Wc, bias4, padding=1)        # (B, H, W, 4*Cout)
    y = y.reshape(B, H, W, 2, 2, Cout)
    y = jnp.transpose(y, (0, 1, 3, 2, 4, 5)).reshape(B, 2 * H, 2 * W, Cout)
    return y


def linear(x, w, b):
    # Tiny (B x dim) GEMMs: plain XLA is faster than a padded Pallas launch.
    return jnp.dot(x.astype(jnp.float32), w) + b


# ----------------------------------------------------------------------------- model pieces
def sinusoidal_emb(time, dim):
    half = dim // 2
    freqs = jnp.exp(jnp.arange(half, dtype=jnp.float32) * -(math.log(10000.0) / (half - 1)))
    args = time[:, None].astype(jnp.float32) * freqs[None, :]
    return jnp.concatenate([jnp.sin(args), jnp.cos(args)], axis=-1)


def convnext_block(p, x, t):
    cond = None
    if ("mlp_w" in p) and (t is not None):
        cond = linear(gelu(t), p["mlp_w"], p["mlp_b"])            # (B, dim)
    h = pallas_depthwise7(x, p["ds_w"], p["ds_b"], cond)          # cond fused
    h = pallas_groupnorm(h, p["gn1_g"], p["gn1_b"], out_dtype=jnp.bfloat16)
    h = conv2d(h, p["c1_w"], p["c1_b"], padding=1)
    h = gelu(h)
    h = pallas_groupnorm(h, p["gn2_g"], p["gn2_b"], out_dtype=jnp.bfloat16)
    res = conv2d(x, p["res_w"], p["res_b"]) if "res_w" in p else x
    h = conv2d(h, p["c2_w"], p["c2_b"], padding=1, residual=res)  # residual fused
    return h


HEADS, DIM_HEAD = 4, 32
HIDDEN = HEADS * DIM_HEAD


def _split_qkv(xn, qkv_w):
    B, H, W, _ = xn.shape
    n = H * W
    qkv = conv2d(xn, qkv_w, None).reshape(B, n, 3, HEADS, DIM_HEAD)
    q = jnp.transpose(qkv[:, :, 0], (0, 2, 3, 1))   # (B, heads, d, n)
    k = jnp.transpose(qkv[:, :, 1], (0, 2, 3, 1))
    v = jnp.transpose(qkv[:, :, 2], (0, 2, 3, 1))
    return q, k, v, n


def linear_attention_prenorm(p, x):
    """PreNorm + LinearAttention (residual added by caller)."""
    B, H, W, C = x.shape
    xn = pallas_groupnorm(x, p["pn_g"], p["pn_b"], out_dtype=jnp.bfloat16)
    q, k, v, n = _split_qkv(xn, p["qkv_w"])
    q = jax.nn.softmax(q, axis=-2)                  # over d
    k = jax.nn.softmax(k, axis=-1)                  # over n
    q = q * (DIM_HEAD ** -0.5)
    G = B * HEADS
    qf = q.reshape(G, DIM_HEAD, n)
    kf = k.reshape(G, DIM_HEAD, n)
    vf = v.reshape(G, DIM_HEAD, n)
    context = pallas_bmm(kf, jnp.transpose(vf, (0, 2, 1)))           # (G, d, e)
    out = pallas_bmm(jnp.transpose(context, (0, 2, 1)), qf)          # (G, e, n)
    out = out.reshape(B, HEADS, DIM_HEAD, n)
    out = jnp.transpose(out, (0, 3, 1, 2)).reshape(B, H, W, HIDDEN)  # (h, c)
    out = conv2d(out, p["out_w"], p["out_b"])
    out = pallas_groupnorm(out, p["gn_g"], p["gn_b"])
    return out


def attention_prenorm(p, x):
    """PreNorm + full softmax Attention (residual added by caller)."""
    B, H, W, C = x.shape
    xn = pallas_groupnorm(x, p["pn_g"], p["pn_b"], out_dtype=jnp.bfloat16)
    q, k, v, n = _split_qkv(xn, p["qkv_w"])
    q = q * (DIM_HEAD ** -0.5)
    G = B * HEADS
    qf = q.reshape(G, DIM_HEAD, n)
    kf = k.reshape(G, DIM_HEAD, n)
    vf = v.reshape(G, DIM_HEAD, n)
    sim = pallas_bmm(jnp.transpose(qf, (0, 2, 1)), kf)               # (G, n, n)
    sim = sim - jnp.max(sim, axis=-1, keepdims=True)
    attn = jax.nn.softmax(sim, axis=-1)
    out = pallas_bmm(attn, jnp.transpose(vf, (0, 2, 1)))             # (G, n, d)
    out = out.reshape(B, HEADS, n, DIM_HEAD)
    out = jnp.transpose(out, (0, 2, 1, 3)).reshape(B, H, W, HIDDEN)  # (h, d)
    return conv2d(out, p["out_w"], p["out_b"])


# ----------------------------------------------------------------------------- parameters
class ParamGen:
    def __init__(self, seed=0):
        self.key = jax.random.PRNGKey(seed)

    def n(self, shape, scale=0.05):
        self.key, k = jax.random.split(self.key)
        return jax.random.normal(k, shape, jnp.float32) * scale


def convnext_params(pg, dim, dim_out, time_dim=None, mult=2):
    p = {}
    if time_dim is not None:
        p["mlp_w"] = pg.n((time_dim, dim))
        p["mlp_b"] = pg.n((dim,))
    p["ds_w"] = pg.n((7, 7, dim))
    p["ds_b"] = pg.n((dim,))
    p["gn1_g"] = jnp.ones((dim,), jnp.float32)
    p["gn1_b"] = jnp.zeros((dim,), jnp.float32)
    p["c1_w"] = pg.n((3, 3, dim, dim_out * mult))
    p["c1_b"] = pg.n((dim_out * mult,))
    p["gn2_g"] = jnp.ones((dim_out * mult,), jnp.float32)
    p["gn2_b"] = jnp.zeros((dim_out * mult,), jnp.float32)
    p["c2_w"] = pg.n((3, 3, dim_out * mult, dim_out))
    p["c2_b"] = pg.n((dim_out,))
    if dim != dim_out:
        p["res_w"] = pg.n((1, 1, dim, dim_out))
        p["res_b"] = pg.n((dim_out,))
    return p


def linattn_params(pg, dim):
    return dict(
        pn_g=jnp.ones((dim,), jnp.float32), pn_b=jnp.zeros((dim,), jnp.float32),
        qkv_w=pg.n((1, 1, dim, 3 * HIDDEN)),
        out_w=pg.n((1, 1, HIDDEN, dim)), out_b=pg.n((dim,)),
        gn_g=jnp.ones((dim,), jnp.float32), gn_b=jnp.zeros((dim,), jnp.float32))


def attn_params(pg, dim):
    return dict(
        pn_g=jnp.ones((dim,), jnp.float32), pn_b=jnp.zeros((dim,), jnp.float32),
        qkv_w=pg.n((1, 1, dim, 3 * HIDDEN)),
        out_w=pg.n((1, 1, HIDDEN, dim)), out_b=pg.n((dim,)))


def build_unet_params(dim=12, channels=3, dim_mults=(1, 2, 4, 8), convnext_mult=2, seed=0):
    pg = ParamGen(seed)
    init_dim = dim // 3 * 2
    dims = [init_dim] + [dim * m for m in dim_mults]
    in_out = list(zip(dims[:-1], dims[1:]))
    time_dim = dim * 4

    params = {
        "init_w": pg.n((7, 7, channels, init_dim)), "init_b": pg.n((init_dim,)),
        "t1_w": pg.n((dim, time_dim)), "t1_b": pg.n((time_dim,)),
        "t2_w": pg.n((time_dim, time_dim)), "t2_b": pg.n((time_dim,)),
    }

    num_res = len(in_out)
    downs = []
    for ind, (d_in, d_out) in enumerate(in_out):
        is_last = ind >= num_res - 1
        lvl = {
            "block1": convnext_params(pg, d_in, d_out, time_dim, convnext_mult),
            "block2": convnext_params(pg, d_out, d_out, time_dim, convnext_mult),
            "attn": linattn_params(pg, d_out),
        }
        if not is_last:
            lvl["down_w"] = pg.n((4, 4, d_out, d_out))
            lvl["down_b"] = pg.n((d_out,))
        downs.append(lvl)
    params["downs"] = downs

    mid_dim = dims[-1]
    params["mid1"] = convnext_params(pg, mid_dim, mid_dim, time_dim, convnext_mult)
    params["mid_attn"] = attn_params(pg, mid_dim)
    params["mid2"] = convnext_params(pg, mid_dim, mid_dim, time_dim, convnext_mult)

    ups = []
    for ind, (d_in, d_out) in enumerate(reversed(in_out[1:])):
        lvl = {
            "block1": convnext_params(pg, d_out * 2, d_in, time_dim, convnext_mult),
            "block2": convnext_params(pg, d_in, d_in, time_dim, convnext_mult),
            "attn": linattn_params(pg, d_in),
            "up_w": pg.n((4, 4, d_in, d_in)),
            "up_b": pg.n((d_in,)),
        }
        ups.append(lvl)
    params["ups"] = ups

    params["final_block"] = convnext_params(pg, dim, dim, None, convnext_mult)
    params["final_w"] = pg.n((1, 1, dim, channels))
    params["final_b"] = pg.n((channels,))
    return params


# ----------------------------------------------------------------------------- forward
def unet_forward(params, x_nchw, time, *, dim):
    x = jnp.transpose(x_nchw.astype(jnp.float32), (0, 2, 3, 1))     # NCHW -> NHWC

    x = conv2d(x, params["init_w"], params["init_b"], padding=3)

    t = sinusoidal_emb(time, dim)
    t = linear(t, params["t1_w"], params["t1_b"])
    t = gelu(t)
    t = linear(t, params["t2_w"], params["t2_b"])

    hs = []
    for lvl in params["downs"]:
        x = convnext_block(lvl["block1"], x, t)
        x = convnext_block(lvl["block2"], x, t)
        x = x + linear_attention_prenorm(lvl["attn"], x)
        hs.append(x)
        if "down_w" in lvl:
            x = conv2d(x, lvl["down_w"], lvl["down_b"], stride=2, padding=1)

    x = convnext_block(params["mid1"], x, t)
    x = x + attention_prenorm(params["mid_attn"], x)
    x = convnext_block(params["mid2"], x, t)

    for lvl in params["ups"]:
        x = jnp.concatenate([x, hs.pop()], axis=-1)                  # channel cat
        x = convnext_block(lvl["block1"], x, t)
        x = convnext_block(lvl["block2"], x, t)
        x = x + linear_attention_prenorm(lvl["attn"], x)
        x = conv_transpose_4_2_1(x, lvl["up_w"], lvl["up_b"])

    x = convnext_block(params["final_block"], x, None)
    x = conv2d(x, params["final_w"], params["final_b"])
    return jnp.transpose(x, (0, 3, 1, 2))                            # NHWC -> NCHW


# ----------------------------------------------------------------------------- main
if __name__ == "__main__":
    B, C, S = 2, 3, 16
    DIM = 12

    key = jax.random.PRNGKey(0)
    kx, kt, kc = jax.random.split(key, 3)
    x = jax.random.normal(kx, (B, C, S, S), jnp.float32)
    time = jax.random.uniform(kt, (B,), jnp.float32, 0.0, 100.0)

    params = build_unet_params(dim=DIM, channels=C, seed=0)

    # ConvTranspose2d(4,2,1) parity-mapping check vs XLA transposed conv
    # (addresses the flagged correctness concern; bf16 MXU => loose tolerance).
    Ct, Ht = 12, 8
    xt = jax.random.normal(kc, (1, Ht, Ht, Ct), jnp.float32)
    wt = jax.random.normal(jax.random.PRNGKey(1), (4, 4, Ct, Ct), jnp.float32) * 0.05
    bt = jax.random.normal(jax.random.PRNGKey(2), (Ct,), jnp.float32) * 0.05
    ref = jax.lax.conv_general_dilated(
        xt, jnp.flip(wt, (0, 1)), window_strides=(1, 1),
        padding=((2, 2), (2, 2)), lhs_dilation=(2, 2),
        dimension_numbers=("NHWC", "HWIO", "NHWC")) + bt
    got = conv_transpose_4_2_1(xt, wt, bt)
    assert jnp.allclose(got, ref, atol=3e-2, rtol=3e-2), \
        float(jnp.max(jnp.abs(got - ref)))

    fwd = jax.jit(partial(unet_forward, dim=DIM))
    out = fwd(params, x, time)
    out = jax.block_until_ready(out)

    assert out.shape == (B, C, S, S), out.shape
    assert bool(jnp.all(jnp.isfinite(out)))
    print("KERNEL_OK")
</pallas_src>

<mosaic_0001>
module attributes {stable_mosaic.version = 11 : i64} {
  func.func @_conv_small_kernel(%arg0: i32, %arg1: memref<9x64x12xbf16, #tpu.memory_space<vmem>>, %arg2: memref<9x12x48xbf16, #tpu.memory_space<vmem>>, %arg3: memref<1x48xf32, #tpu.memory_space<vmem>>, %arg4: memref<64x48xf32, #tpu.memory_space<vmem>>) attributes {dimension_semantics = [#tpu.dimension_semantics<arbitrary>], iteration_bounds = array<i64: 1>, scalar_prefetch = 0 : i64, scratch_operands = 0 : i64, tpu.core_type = #tpu.core_type<tc>, window_params = [{pipeline_mode = #tpu.pipeline_mode<synchronous>, transform_indices = @transform_0, window_bounds = array<i64: 9, 64, 12>}, {pipeline_mode = #tpu.pipeline_mode<synchronous>, transform_indices = @transform_1, window_bounds = array<i64: 9, 12, 48>}, {pipeline_mode = #tpu.pipeline_mode<synchronous>, transform_indices = @transform_2, window_bounds = array<i64: 1, 48>}, {pipeline_mode = #tpu.pipeline_mode<synchronous>, transform_indices = @transform_3, window_bounds = array<i64: 64, 48>}]} {
    %cst = arith.constant 0.000000e+00 : f32
    %0 = vector.broadcast %cst : f32 to vector<64x48xf32>
    %c0 = arith.constant 0 : index
    %c0_0 = arith.constant 0 : index
    %c0_1 = arith.constant 0 : index
    %1 = vector.load %arg1[%c0, %c0_0, %c0_1] : memref<9x64x12xbf16, #tpu.memory_space<vmem>>, vector<1x64x12xbf16>
    %2 = vector.shape_cast %1 : vector<1x64x12xbf16> to vector<64x12xbf16>
    %c0_2 = arith.constant 0 : index
    %c0_3 = arith.constant 0 : index
    %c0_4 = arith.constant 0 : index
    %3 = vector.load %arg2[%c0_2, %c0_3, %c0_4] : memref<9x12x48xbf16, #tpu.memory_space<vmem>>, vector<1x12x48xbf16>
    %4 = vector.shape_cast %3 : vector<1x12x48xbf16> to vector<12x48xbf16>
    %cst_5 = arith.constant dense<0.000000e+00> : vector<64x48xf32>
    %5 = tpu.matmul %2, %4, %cst_5 {dimension_numbers = #tpu.dot_dimension_numbers<[1], [0], [0], [1], [0, 0, 1, 1], [], []>} : vector<64x12xbf16>, vector<12x48xbf16>, vector<64x48xf32> -> vector<64x48xf32>
    %6 = arith.addf %0, %5 : vector<64x48xf32>
    %c1 = arith.constant 1 : index
    %c0_6 = arith.constant 0 : index
    %c0_7 = arith.constant 0 : index
    %7 = vector.load %arg1[%c1, %c0_6, %c0_7] : memref<9x64x12xbf16, #tpu.memory_space<vmem>>, vector<1x64x12xbf16>
    %8 = vector.shape_cast %7 : vector<1x64x12xbf16> to vector<64x12xbf16>
    %c1_8 = arith.constant 1 : index
    %c0_9 = arith.constant 0 : index
    %c0_10 = arith.constant 0 : index
    %9 = vector.load %arg2[%c1_8, %c0_9, %c0_10] : memref<9x12x48xbf16, #tpu.memory_space<vmem>>, vector<1x12x48xbf16>
    %10 = vector.shape_cast %9 : vector<1x12x48xbf16> to vector<12x48xbf16>
    %cst_11 = arith.constant dense<0.000000e+00> : vector<64x48xf32>
    %11 = tpu.matmul %8, %10, %cst_11 {dimension_numbers = #tpu.dot_dimension_numbers<[1], [0], [0], [1], [0, 0, 1, 1], [], []>} : vector<64x12xbf16>, vector<12x48xbf16>, vector<64x48xf32> -> vector<64x48xf32>
    %12 = arith.addf %6, %11 : vector<64x48xf32>
    %c2 = arith.constant 2 : index
    %c0_12 = arith.constant 0 : index
    %c0_13 = arith.constant 0 : index
    %13 = vector.load %arg1[%c2, %c0_12, %c0_13] : memref<9x64x12xbf16, #tpu.memory_space<vmem>>, vector<1x64x12xbf16>
    %14 = vector.shape_cast %13 : vector<1x64x12xbf16> to vector<64x12xbf16>
    %c2_14 = arith.constant 2 : index
    %c0_15 = arith.constant 0 : index
    %c0_16 = arith.constant 0 : index
    %15 = vector.load %arg2[%c2_14, %c0_15, %c0_16] : memref<9x12x48xbf16, #tpu.memory_space<vmem>>, vector<1x12x48xbf16>
    %16 = vector.shape_cast %15 : vector<1x12x48xbf16> to vector<12x48xbf16>
    %cst_17 = arith.constant dense<0.000000e+00> : vector<64x48xf32>
    %17 = tpu.matmul %14, %16, %cst_17 {dimension_numbers = #tpu.dot_dimension_numbers<[1], [0], [0], [1], [0, 0, 1, 1], [], []>} : vector<64x12xbf16>, vector<12x48xbf16>, vector<64x48xf32> -> vector<64x48xf32>
    %18 = arith.addf %12, %17 : vector<64x48xf32>
    %c3 = arith.constant 3 : index
    %c0_18 = arith.constant 0 : index
    %c0_19 = arith.constant 0 : index
    %19 = vector.load %arg1[%c3, %c0_18, %c0_19] : memref<9x64x12xbf16, #tpu.memory_space<vmem>>, vector<1x64x12xbf16>
    %20 = vector.shape_cast %19 : vector<1x64x12xbf16> to vector<64x12xbf16>
    %c3_20 = arith.constant 3 : index
    %c0_21 = arith.constant 0 : index
    %c0_22 = arith.constant 0 : index
    %21 = vector.load %arg2[%c3_20, %c0_21, %c0_22] : memref<9x12x48xbf16, #tpu.memory_space<vmem>>, vector<1x12x48xbf16>
    %22 = vector.shape_cast %21 : vector<1x12x48xbf16> to vector<12x48xbf16>
    %cst_23 = arith.constant dense<0.000000e+00> : vector<64x48xf32>
    %23 = tpu.matmul %20, %22, %cst_23 {dimension_numbers = #tpu.dot_dimension_numbers<[1], [0], [0], [1], [0, 0, 1, 1], [], []>} : vector<64x12xbf16>, vector<12x48xbf16>, vector<64x48xf32> -> vector<64x48xf32>
    %24 = arith.addf %18, %23 : vector<64x48xf32>
    %c4 = arith.constant 4 : index
    %c0_24 = arith.constant 0 : index
    %c0_25 = arith.constant 0 : index
    %25 = vector.load %arg1[%c4, %c0_24, %c0_25] : memref<9x64x12xbf16, #tpu.memory_space<vmem>>, vector<1x64x12xbf16>
    %26 = vector.shape_cast %25 : vector<1x64x12xbf16> to vector<64x12xbf16>
    %c4_26 = arith.constant 4 : index
    %c0_27 = arith.constant 0 : index
    %c0_28 = arith.constant 0 : index
    %27 = vector.load %arg2[%c4_26, %c0_27, %c0_28] : memref<9x12x48xbf16, #tpu.memory_space<vmem>>, vector<1x12x48xbf16>
    %28 = vector.shape_cast %27 : vector<1x12x48xbf16> to vector<12x48xbf16>
    %cst_29 = arith.constant dense<0.000000e+00> : vector<64x48xf32>
    %29 = tpu.matmul %26, %28, %cst_29 {dimension_numbers = #tpu.dot_dimension_numbers<[1], [0], [0], [1], [0, 0, 1, 1], [], []>} : vector<64x12xbf16>, vector<12x48xbf16>, vector<64x48xf32> -> vector<64x48xf32>
    %30 = arith.addf %24, %29 : vector<64x48xf32>
    %c5 = arith.constant 5 : index
    %c0_30 = arith.constant 0 : index
    %c0_31 = arith.constant 0 : index
    %31 = vector.load %arg1[%c5, %c0_30, %c0_31] : memref<9x64x12xbf16, #tpu.memory_space<vmem>>, vector<1x64x12xbf16>
    %32 = vector.shape_cast %31 : vector<1x64x12xbf16> to vector<64x12xbf16>
    %c5_32 = arith.constant 5 : index
    %c0_33 = arith.constant 0 : index
    %c0_34 = arith.constant 0 : index
    %33 = vector.load %arg2[%c5_32, %c0_33, %c0_34] : memref<9x12x48xbf16, #tpu.memory_space<vmem>>, vector<1x12x48xbf16>
    %34 = vector.shape_cast %33 : vector<1x12x48xbf16> to vector<12x48xbf16>
    %cst_35 = arith.constant dense<0.000000e+00> : vector<64x48xf32>
    %35 = tpu.matmul %32, %34, %cst_35 {dimension_numbers = #tpu.dot_dimension_numbers<[1], [0], [0], [1], [0, 0, 1, 1], [], []>} : vector<64x12xbf16>, vector<12x48xbf16>, vector<64x48xf32> -> vector<64x48xf32>
    %36 = arith.addf %30, %35 : vector<64x48xf32>
    %c6 = arith.constant 6 : index
    %c0_36 = arith.constant 0 : index
    %c0_37 = arith.constant 0 : index
    %37 = vector.load %arg1[%c6, %c0_36, %c0_37] : memref<9x64x12xbf16, #tpu.memory_space<vmem>>, vector<1x64x12xbf16>
    %38 = vector.shape_cast %37 : vector<1x64x12xbf16> to vector<64x12xbf16>
    %c6_38 = arith.constant 6 : index
    %c0_39 = arith.constant 0 : index
    %c0_40 = arith.constant 0 : index
    %39 = vector.load %arg2[%c6_38, %c0_39, %c0_40] : memref<9x12x48xbf16, #tpu.memory_space<vmem>>, vector<1x12x48xbf16>
    %40 = vector.shape_cast %39 : vector<1x12x48xbf16> to vector<12x48xbf16>
    %cst_41 = arith.constant dense<0.000000e+00> : vector<64x48xf32>
    %41 = tpu.matmul %38, %40, %cst_41 {dimension_numbers = #tpu.dot_dimension_numbers<[1], [0], [0], [1], [0, 0, 1, 1], [], []>} : vector<64x12xbf16>, vector<12x48xbf16>, vector<64x48xf32> -> vector<64x48xf32>
    %42 = arith.addf %36, %41 : vector<64x48xf32>
    %c7 = arith.constant 7 : index
    %c0_42 = arith.constant 0 : index
    %c0_43 = arith.constant 0 : index
    %43 = vector.load %arg1[%c7, %c0_42, %c0_43] : memref<9x64x12xbf16, #tpu.memory_space<vmem>>, vector<1x64x12xbf16>
    %44 = vector.shape_cast %43 : vector<1x64x12xbf16> to vector<64x12xbf16>
    %c7_44 = arith.constant 7 : index
    %c0_45 = arith.constant 0 : index
    %c0_46 = arith.constant 0 : index
    %45 = vector.load %arg2[%c7_44, %c0_45, %c0_46] : memref<9x12x48xbf16, #tpu.memory_space<vmem>>, vector<1x12x48xbf16>
    %46 = vector.shape_cast %45 : vector<1x12x48xbf16> to vector<12x48xbf16>
    %cst_47 = arith.constant dense<0.000000e+00> : vector<64x48xf32>
    %47 = tpu.matmul %44, %46, %cst_47 {dimension_numbers = #tpu.dot_dimension_numbers<[1], [0], [0], [1], [0, 0, 1, 1], [], []>} : vector<64x12xbf16>, vector<12x48xbf16>, vector<64x48xf32> -> vector<64x48xf32>
    %48 = arith.addf %42, %47 : vector<64x48xf32>
    %c8 = arith.constant 8 : index
    %c0_48 = arith.constant 0 : index
    %c0_49 = arith.constant 0 : index
    %49 = vector.load %arg1[%c8, %c0_48, %c0_49] : memref<9x64x12xbf16, #tpu.memory_space<vmem>>, vector<1x64x12xbf16>
    %50 = vector.shape_cast %49 : vector<1x64x12xbf16> to vector<64x12xbf16>
    %c8_50 = arith.constant 8 : index
    %c0_51 = arith.constant 0 : index
    %c0_52 = arith.constant 0 : index
    %51 = vector.load %arg2[%c8_50, %c0_51, %c0_52] : memref<9x12x48xbf16, #tpu.memory_space<vmem>>, vector<1x12x48xbf16>
    %52 = vector.shape_cast %51 : vector<1x12x48xbf16> to vector<12x48xbf16>
    %cst_53 = arith.constant dense<0.000000e+00> : vector<64x48xf32>
    %53 = tpu.matmul %50, %52, %cst_53 {dimension_numbers = #tpu.dot_dimension_numbers<[1], [0], [0], [1], [0, 0, 1, 1], [], []>} : vector<64x12xbf16>, vector<12x48xbf16>, vector<64x48xf32> -> vector<64x48xf32>
    %54 = arith.addf %48, %53 : vector<64x48xf32>
    %c0_54 = arith.constant 0 : index
    %c0_55 = arith.constant 0 : index
    %55 = vector.load %arg3[%c0_54, %c0_55] : memref<1x48xf32, #tpu.memory_space<vmem>>, vector<1x48xf32>
    %56 = vector.broadcast %55 : vector<1x48xf32> to vector<64x48xf32>
    %57 = arith.addf %54, %56 : vector<64x48xf32>
    %c0_56 = arith.constant 0 : index
    %c0_57 = arith.constant 0 : index
    %58 = vector.load %arg4[%c0_56, %c0_57] : memref<64x48xf32, #tpu.memory_space<vmem>>, vector<64x48xf32>
    tpu.vector_store %arg4[%c0_56, %c0_57], %57 {strides = array<i32>} : memref<64x48xf32, #tpu.memory_space<vmem>>, vector<64x48xf32>,
    return
  }
  func.func @transform_0(%arg0: i32) -> (i32, i32, i32) {
    %c0_i32 = arith.constant 0 : i32
    %c0_i32_0 = arith.constant 0 : i32
    %c0_i32_1 = arith.constant 0 : i32
    %c0_i32_2 = arith.constant 0 : i32
    return %c0_i32, %c0_i32_0, %c0_i32_1 : i32, i32, i32
  }
  func.func @transform_1(%arg0: i32) -> (i32, i32, i32) {
    %c0_i32 = arith.constant 0 : i32
    %c0_i32_0 = arith.constant 0 : i32
    %c0_i32_1 = arith.constant 0 : i32
    %c0_i32_2 = arith.constant 0 : i32
    return %c0_i32, %c0_i32_0, %c0_i32_1 : i32, i32, i32
  }
  func.func @transform_2(%arg0: i32) -> (i32, i32) {
    %c0_i32 = arith.constant 0 : i32
    %c0_i32_0 = arith.constant 0 : i32
    %c0_i32_1 = arith.constant 0 : i32
    return %c0_i32, %c0_i32_0 : i32, i32
  }
  func.func @transform_3(%arg0: i32) -> (i32, i32) {
    %c0_i32 = arith.constant 0 : i32
    %c0_i32_0 = arith.constant 0 : i32
    %c0_i32_1 = arith.constant 0 : i32
    return %c0_i32, %c0_i32_0 : i32, i32
  }
}

</mosaic_0001>

<llo_original>
// kernel: tpu_custom_call.1
$region0: #{tpu_custom_call.1}
  #allocation0 [shape = 'u32[]', space=smem, size = 0x4, offset = 0x4, fixed_abs, tag = 'smem constant byte address 0x4 - core index']
  #allocation1 [shape = 'u32[72,128]{1,0:T(1,128)}', space=vmem, size = 0x9000, scoped, tag = 'internal scratch']
  %s0 = inlined_call_operand.vmem [shape: bf16[9,64,12], index: 0, kind: input, shape index: {}]
  %s1 = inlined_call_operand.vmem [shape: bf16[9,12,48], index: 1, kind: input, shape index: {}]
  %s2 = inlined_call_operand.vmem [shape: f32[1,48], index: 2, kind: input, shape index: {}]
  %s3 = inlined_call_operand.vmem [shape: f32[64,48], index: 3, kind: output, shape index: {}]
  %s4 = sld [smem:[#allocation0]]
  $region22: #{tpu_custom_call.1} parent=0
    _
  %s6 = ssub.s32 1, %s4
  %s7 = scalar_select 0, %s6, %s4
  // Predicated region
  $region2: #{tpu_custom_call.1} parent=0 // pred_check
    _
  $region3: #{tpu_custom_call.1} parent=0 // pred_check_branch
    %9 = sbr.rel (0) target = $region5
  $region4: #{tpu_custom_call.1} parent=0 // pred_region
    _
  $region5: #{tpu_custom_call.1} parent=0 // pred_fallthru
    _
  // Predicated region
  $region6: #{tpu_custom_call.1} parent=0 // pred_check
    _
  $region7: #{tpu_custom_call.1} parent=0 // pred_check_branch
    %11 = sbr.rel (0) target = $region9
  $region8: #{tpu_custom_call.1} parent=0 // pred_region
    _
  $region9: #{tpu_custom_call.1} parent=0 // pred_fallthru
    _
  // Predicated region
  $region10: #{tpu_custom_call.1} parent=0 // pred_check
    _
  $region11: #{tpu_custom_call.1} parent=0 // pred_check_branch
    %13 = sbr.rel (0) target = $region13
  $region12: #{tpu_custom_call.1} parent=0 // pred_region
    _
  $region13: #{tpu_custom_call.1} parent=0 // pred_fallthru
    _
  %v15 = vld [vmem:[%s0] sm:$0xf]
  %v16 = vld [vmem:[%s0 + $0x4] sm:$0xf]
  %v17 = vld [vmem:[%s0 + $0x8] sm:$0xf]
  %v18 = vld [vmem:[%s0 + $0xc] sm:$0xf]
  %v19 = vld [vmem:[%s0 + $0x10] sm:$0xf]
  %v20 = vld [vmem:[%s0 + $0x14] sm:$0xf]
  %v21 = vld [vmem:[%s0 + $0x18] sm:$0xf]
  %v22 = vld [vmem:[%s0 + $0x1c] sm:$0xf]
  %v23 = vld [vmem:[%s1] sm:$0xf]
  %v24 = vld [vmem:[%s1 + $0x4] sm:$0x3]
  %s25 = scalar_lea.vmem %s0, 32
  %v26 = vld [vmem:[%s25] sm:$0xf]
  %v27 = vld [vmem:[%s25 + $0x4] sm:$0xf]
  %v28 = vld [vmem:[%s25 + $0x8] sm:$0xf]
  %v29 = vld [vmem:[%s25 + $0xc] sm:$0xf]
  %v30 = vld [vmem:[%s25 + $0x10] sm:$0xf]
  %v31 = vld [vmem:[%s25 + $0x14] sm:$0xf]
  %v32 = vld [vmem:[%s25 + $0x18] sm:$0xf]
  %v33 = vld [vmem:[%s25 + $0x1c] sm:$0xf]
  %s34 = scalar_lea.vmem %s1, 8
  %v35 = vld [vmem:[%s34] sm:$0xf]
  %v36 = vld [vmem:[%s34 + $0x4] sm:$0x3]
  %v45 = vunpack.c.l.b16 %v26
  %v46 = vunpack.c.l.b16 %v27
  %v47 = vunpack.c.l.b16 %v28
  %v48 = vunpack.c.l.b16 %v29
  %v49 = vunpack.c.l.b16 %v30
  %v50 = vunpack.c.l.b16 %v31
  %v51 = vunpack.c.l.b16 %v32
  %v52 = vunpack.c.l.b16 %v33
  %v53 = vpack.c.b16 %v46, %v45
  %v54 = vpack.c.b16 %v48, %v47
  %v55 = vpack.c.b16 %v50, %v49
  %v56 = vpack.c.b16 %v52, %v51
  %v59 = vunpack.c.l.b16 %v35
  %v60 = vunpack.c.l.b16 %v36
  %v61 = vpack.c.b16 %v60, %v59
  %vm62 = vcmask 97280
  %v64 = vsel %vm62, %v53, 0
  %v67 = vsel %vm62, %v54, 0
  %v70 = vsel %vm62, %v55, 0
  %v73 = vsel %vm62, %v56, 0
  %vm75 = vcmask 1045504
  %v77 = vsel %vm75, %v61, 0
  %79 = vmatpush.bf16.msra.mxu0 0
  %80 = vmatpush.bf16.msra.mxu0 0
  %81 = vmatpush.bf16.msra.mxu0 0
  %82 = vmatpush.bf16.msra.mxu0 0
  %83 = vmatpush.bf16.msra.mxu0 0
  %84 = vmatpush.bf16.msra.mxu0 0
  %85 = vmatpush.bf16.msra.mxu0 0
  %86 = vmatpush.bf16.msra.mxu0 %v77
  %87 = vmatmul.bf16.gmra.mxu0 %v64
  %v88 = vpop.f32.mrf.mxu0
  %v89 = vadd.f32 0.0, %v88
  %v90 = vpop.f32.mrf.mxu0
  %v91 = vadd.f32 0.0, %v90
  %92 = vmatmul.bf16.gmra.mxu0 %v67
  %v93 = vpop.f32.mrf.mxu0
  %v94 = vadd.f32 0.0, %v93
  %v95 = vpop.f32.mrf.mxu0
  %v96 = vadd.f32 0.0, %v95
  %97 = vmatmul.bf16.gmra.mxu0 %v70
  %v98 = vpop.f32.mrf.mxu0
  %v99 = vadd.f32 0.0, %v98
  %v100 = vpop.f32.mrf.mxu0
  %v101 = vadd.f32 0.0, %v100
  %102 = vmatmul.bf16.gmra.mxu0 %v73
  %v103 = vpop.f32.mrf.mxu0
  %v104 = vadd.f32 0.0, %v103
  %v105 = vpop.f32.mrf.mxu0
  %v106 = vadd.f32 0.0, %v105
  %107 = vdwg.mxu0
  %v116 = vunpack.c.l.b16 %v15
  %v117 = vunpack.c.l.b16 %v16
  %v118 = vunpack.c.l.b16 %v17
  %v119 = vunpack.c.l.b16 %v18
  %v120 = vunpack.c.l.b16 %v19
  %v121 = vunpack.c.l.b16 %v20
  %v122 = vunpack.c.l.b16 %v21
  %v123 = vunpack.c.l.b16 %v22
  %v124 = vpack.c.b16 %v117, %v116
  %v125 = vpack.c.b16 %v119, %v118
  %v126 = vpack.c.b16 %v121, %v120
  %v127 = vpack.c.b16 %v123, %v122
  %v130 = vunpack.c.l.b16 %v23
  %v131 = vunpack.c.l.b16 %v24
  %v132 = vpack.c.b16 %v131, %v130
  %v134 = vsel %vm62, %v124, 0
  %v137 = vsel %vm62, %v125, 0
  %v140 = vsel %vm62, %v126, 0
  %v143 = vsel %vm62, %v127, 0
  %v146 = vsel %vm75, %v132, 0
  %148 = vmatpush.bf16.msra.mxu0 0
  %149 = vmatpush.bf16.msra.mxu0 0
  %150 = vmatpush.bf16.msra.mxu0 0
  %151 = vmatpush.bf16.msra.mxu0 0
  %152 = vmatpush.bf16.msra.mxu0 0
  %153 = vmatpush.bf16.msra.mxu0 0
  %154 = vmatpush.bf16.msra.mxu0 0
  %155 = vmatpush.bf16.msra.mxu0 %v146
  %156 = vmatmul.bf16.gmra.mxu0 %v134
  %v157 = vpop.f32.mrf.mxu0
  %v158 = vadd.f32 %v89, %v157
  %v159 = vpop.f32.mrf.mxu0
  %v160 = vadd.f32 %v91, %v159
  %161 = vmatmul.bf16.gmra.mxu0 %v137
  %v162 = vpop.f32.mrf.mxu0
  %v163 = vadd.f32 %v94, %v162
  %v164 = vpop.f32.mrf.mxu0
  %v165 = vadd.f32 %v96, %v164
  %166 = vmatmul.bf16.gmra.mxu0 %v140
  %v167 = vpop.f32.mrf.mxu0
  %v168 = vadd.f32 %v99, %v167
  %v169 = vpop.f32.mrf.mxu0
  %v170 = vadd.f32 %v101, %v169
  %171 = vmatmul.bf16.gmra.mxu0 %v143
  %v172 = vpop.f32.mrf.mxu0
  %v173 = vadd.f32 %v104, %v172
  %v174 = vpop.f32.mrf.mxu0
  %v175 = vadd.f32 %v106, %v174
  %176 = vdwg.mxu0
  %s177 = scalar_lea.vmem %s0, 64
  %v178 = vld [vmem:[%s177] sm:$0xf]
  %v179 = vld [vmem:[%s177 + $0x4] sm:$0xf]
  %v180 = vld [vmem:[%s177 + $0x8] sm:$0xf]
  %v181 = vld [vmem:[%s177 + $0xc] sm:$0xf]
  %v182 = vld [vmem:[%s177 + $0x10] sm:$0xf]
  %v183 = vld [vmem:[%s177 + $0x14] sm:$0xf]
  %v184 = vld [vmem:[%s177 + $0x18] sm:$0xf]
  %v185 = vld [vmem:[%s177 + $0x1c] sm:$0xf]
  %s186 = scalar_lea.vmem %s1, 16
  %v187 = vld [vmem:[%s186] sm:$0xf]
  %v188 = vld [vmem:[%s186 + $0x4] sm:$0x3]
  %v197 = vunpack.c.l.b16 %v178
  %v198 = vunpack.c.l.b16 %v179
  %v199 = vunpack.c.l.b16 %v180
  %v200 = vunpack.c.l.b16 %v181
  %v201 = vunpack.c.l.b16 %v182
  %v202 = vunpack.c.l.b16 %v183
  %v203 = vunpack.c.l.b16 %v184
  %v204 = vunpack.c.l.b16 %v185
  %v205 = vpack.c.b16 %v198, %v197
  %v206 = vpack.c.b16 %v200, %v199
  %v207 = vpack.c.b16 %v202, %v201
  %v208 = vpack.c.b16 %v204, %v203
  %v211 = vunpack.c.l.b16 %v187
  %v212 = vunpack.c.l.b16 %v188
  %v213 = vpack.c.b16 %v212, %v211
  %v215 = vsel %vm62, %v205, 0
  %v218 = vsel %vm62, %v206, 0
  %v221 = vsel %vm62, %v207, 0
  %v224 = vsel %vm62, %v208, 0
  %v227 = vsel %vm75, %v213, 0
  %229 = vmatpush.bf16.msra.mxu0 0
  %230 = vmatpush.bf16.msra.mxu0 0
  %231 = vmatpush.bf16.msra.mxu0 0
  %232 = vmatpush.bf16.msra.mxu0 0
  %233 = vmatpush.bf16.msra.mxu0 0
  %234 = vmatpush.bf16.msra.mxu0 0
  %235 = vmatpush.bf16.msra.mxu0 0
  %236 = vmatpush.bf16.msra.mxu0 %v227
  %237 = vmatmul.bf16.gmra.mxu0 %v215
  %v238 = vpop.f32.mrf.mxu0
  %v239 = vadd.f32 0.0, %v238
  %v240 = vpop.f32.mrf.mxu0
  %v241 = vadd.f32 0.0, %v240
  %242 = vmatmul.bf16.gmra.mxu0 %v218
  %v243 = vpop.f32.mrf.mxu0
  %v244 = vadd.f32 0.0, %v243
  %v245 = vpop.f32.mrf.mxu0
  %v246 = vadd.f32 0.0, %v245
  %247 = vmatmul.bf16.gmra.mxu0 %v221
  %v248 = vpop.f32.mrf.mxu0
  %v249 = vadd.f32 0.0, %v248
  %v250 = vpop.f32.mrf.mxu0
  %v251 = vadd.f32 0.0, %v250
  %252 = vmatmul.bf16.gmra.mxu0 %v224
  %v253 = vpop.f32.mrf.mxu0
  %v254 = vadd.f32 0.0, %v253
  %v255 = vpop.f32.mrf.mxu0
  %v256 = vadd.f32 0.0, %v255
  %257 = vdwg.mxu0
  %v258 = vadd.f32 %v158, %v239
  %v259 = vadd.f32 %v160, %v241
  %v260 = vadd.f32 %v163, %v244
  %v261 = vadd.f32 %v165, %v246
  %v262 = vadd.f32 %v168, %v249
  %v263 = vadd.f32 %v170, %v251
  %v264 = vadd.f32 %v173, %v254
  %v265 = vadd.f32 %v175, %v256
  %s266 = scalar_lea.vmem %s0, 96
  %v267 = vld [vmem:[%s266] sm:$0xf]
  %v268 = vld [vmem:[%s266 + $0x4] sm:$0xf]
  %v269 = vld [vmem:[%s266 + $0x8] sm:$0xf]
  %v270 = vld [vmem:[%s266 + $0xc] sm:$0xf]
  %v271 = vld [vmem:[%s266 + $0x10] sm:$0xf]
  %v272 = vld [vmem:[%s266 + $0x14] sm:$0xf]
  %v273 = vld [vmem:[%s266 + $0x18] sm:$0xf]
  %v274 = vld [vmem:[%s266 + $0x1c] sm:$0xf]
  %s275 = scalar_lea.vmem %s1, 24
  %v276 = vld [vmem:[%s275] sm:$0xf]
  %v277 = vld [vmem:[%s275 + $0x4] sm:$0x3]
  %v286 = vunpack.c.l.b16 %v267
  %v287 = vunpack.c.l.b16 %v268
  %v288 = vunpack.c.l.b16 %v269
  %v289 = vunpack.c.l.b16 %v270
  %v290 = vunpack.c.l.b16 %v271
  %v291 = vunpack.c.l.b16 %v272
  %v292 = vunpack.c.l.b16 %v273
  %v293 = vunpack.c.l.b16 %v274
  %v294 = vpack.c.b16 %v287, %v286
  %v295 = vpack.c.b16 %v289, %v288
  %v296 = vpack.c.b16 %v291, %v290
  %v297 = vpack.c.b16 %v293, %v292
  %v300 = vunpack.c.l.b16 %v276
  %v301 = vunpack.c.l.b16 %v277
  %v302 = vpack.c.b16 %v301, %v300
  %v304 = vsel %vm62, %v294, 0
  %v307 = vsel %vm62, %v295, 0
  %v310 = vsel %vm62, %v296, 0
  %v313 = vsel %vm62, %v297, 0
  %v316 = vsel %vm75, %v302, 0
  %318 = vmatpush.bf16.msra.mxu0 0
  %319 = vmatpush.bf16.msra.mxu0 0
  %320 = vmatpush.bf16.msra.mxu0 0
  %321 = vmatpush.bf16.msra.mxu0 0
  %322 = vmatpush.bf16.msra.mxu0 0
  %323 = vmatpush.bf16.msra.mxu0 0
  %324 = vmatpush.bf16.msra.mxu0 0
  %325 = vmatpush.bf16.msra.mxu0 %v316
  %326 = vmatmul.bf16.gmra.mxu0 %v304
  %v327 = vpop.f32.mrf.mxu0
  %v328 = vadd.f32 0.0, %v327
  %v329 = vpop.f32.mrf.mxu0
  %v330 = vadd.f32 0.0, %v329
  %331 = vmatmul.bf16.gmra.mxu0 %v307
  %v332 = vpop.f32.mrf.mxu0
  %v333 = vadd.f32 0.0, %v332
  %v334 = vpop.f32.mrf.mxu0
  %v335 = vadd.f32 0.0, %v334
  %336 = vmatmul.bf16.gmra.mxu0 %v310
  %v337 = vpop.f32.mrf.mxu0
  %v338 = vadd.f32 0.0, %v337
  %v339 = vpop.f32.mrf.mxu0
  %v340 = vadd.f32 0.0, %v339
  %341 = vmatmul.bf16.gmra.mxu0 %v313
  %v342 = vpop.f32.mrf.mxu0
  %v343 = vadd.f32 0.0, %v342
  %v344 = vpop.f32.mrf.mxu0
  %v345 = vadd.f32 0.0, %v344
  %346 = vdwg.mxu0
  %v347 = vadd.f32 %v258, %v328
  %v348 = vadd.f32 %v259, %v330
  %v349 = vadd.f32 %v260, %v333
  %v350 = vadd.f32 %v261, %v335
  %v351 = vadd.f32 %v262, %v338
  %v352 = vadd.f32 %v263, %v340
  %v353 = vadd.f32 %v264, %v343
  %v354 = vadd.f32 %v265, %v345
  %s355 = scalar_lea.vmem %s0, 128
  %v356 = vld [vmem:[%s355] sm:$0xf]
  %v357 = vld [vmem:[%s355 + $0x4] sm:$0xf]
  %v358 = vld [vmem:[%s355 + $0x8] sm:$0xf]
  %v359 = vld [vmem:[%s355 + $0xc] sm:$0xf]
  %v360 = vld [vmem:[%s355 + $0x10] sm:$0xf]
  %v361 = vld [vmem:[%s355 + $0x14] sm:$0xf]
  %v362 = vld [vmem:[%s355 + $0x18] sm:$0xf]
  %v363 = vld [vmem:[%s355 + $0x1c] sm:$0xf]
  %s364 = scalar_lea.vmem %s1, 32
  %v365 = vld [vmem:[%s364] sm:$0xf]
  %v366 = vld [vmem:[%s364 + $0x4] sm:$0x3]
  %v375 = vunpack.c.l.b16 %v356
  %v376 = vunpack.c.l.b16 %v357
  %v377 = vunpack.c.l.b16 %v358
  %v378 = vunpack.c.l.b16 %v359
  %v379 = vunpack.c.l.b16 %v360
  %v380 = vunpack.c.l.b16 %v361
  %v381 = vunpack.c.l.b16 %v362
  %v382 = vunpack.c.l.b16 %v363
  %v383 = vpack.c.b16 %v376, %v375
  %v384 = vpack.c.b16 %v378, %v377
  %v385 = vpack.c.b16 %v380, %v379
  %v386 = vpack.c.b16 %v382, %v381
  %v389 = vunpack.c.l.b16 %v365
  %v390 = vunpack.c.l.b16 %v366
  %v391 = vpack.c.b16 %v390, %v389
  %v393 = vsel %vm62, %v383, 0
  %v396 = vsel %vm62, %v384, 0
  %v399 = vsel %vm62, %v385, 0
  %v402 = vsel %vm62, %v386, 0
  %v405 = vsel %vm75, %v391, 0
  %407 = vmatpush.bf16.msra.mxu0 0
  %408 = vmatpush.bf16.msra.mxu0 0
  %409 = vmatpush.bf16.msra.mxu0 0
  %410 = vmatpush.bf16.msra.mxu0 0
  %411 = vmatpush.bf16.msra.mxu0 0
  %412 = vmatpush.bf16.msra.mxu0 0
  %413 = vmatpush.bf16.msra.mxu0 0
  %414 = vmatpush.bf16.msra.mxu0 %v405
  %415 = vmatmul.bf16.gmra.mxu0 %v393
  %v416 = vpop.f32.mrf.mxu0
  %v417 = vadd.f32 0.0, %v416
  %v418 = vpop.f32.mrf.mxu0
  %v419 = vadd.f32 0.0, %v418
  %420 = vmatmul.bf16.gmra.mxu0 %v396
  %v421 = vpop.f32.mrf.mxu0
  %v422 = vadd.f32 0.0, %v421
  %v423 = vpop.f32.mrf.mxu0
  %v424 = vadd.f32 0.0, %v423
  %425 = vmatmul.bf16.gmra.mxu0 %v399
  %v426 = vpop.f32.mrf.mxu0
  %v427 = vadd.f32 0.0, %v426
  %v428 = vpop.f32.mrf.mxu0
  %v429 = vadd.f32 0.0, %v428
  %430 = vmatmul.bf16.gmra.mxu0 %v402
  %v431 = vpop.f32.mrf.mxu0
  %v432 = vadd.f32 0.0, %v431
  %v433 = vpop.f32.mrf.mxu0
  %v434 = vadd.f32 0.0, %v433
  %435 = vdwg.mxu0
  %v436 = vadd.f32 %v347, %v417
  %v437 = vadd.f32 %v348, %v419
  %v438 = vadd.f32 %v349, %v422
  %v439 = vadd.f32 %v350, %v424
  %v440 = vadd.f32 %v351, %v427
  %v441 = vadd.f32 %v352, %v429
  %v442 = vadd.f32 %v353, %v432
  %v443 = vadd.f32 %v354, %v434
  %s444 = scalar_lea.vmem %s0, 160
  %v445 = vld [vmem:[%s444] sm:$0xf]
  %v446 = vld [vmem:[%s444 + $0x4] sm:$0xf]
  %v447 = vld [vmem:[%s444 + $0x8] sm:$0xf]
  %v448 = vld [vmem:[%s444 + $0xc] sm:$0xf]
  %v449 = vld [vmem:[%s444 + $0x10] sm:$0xf]
  %v450 = vld [vmem:[%s444 + $0x14] sm:$0xf]
  %v451 = vld [vmem:[%s444 + $0x18] sm:$0xf]
  %v452 = vld [vmem:[%s444 + $0x1c] sm:$0xf]
  %s453 = scalar_lea.vmem %s1, 40
  %v454 = vld [vmem:[%s453] sm:$0xf]
  %v455 = vld [vmem:[%s453 + $0x4] sm:$0x3]
  %v464 = vunpack.c.l.b16 %v445
  %v465 = vunpack.c.l.b16 %v446
  %v466 = vunpack.c.l.b16 %v447
  %v467 = vunpack.c.l.b16 %v448
  %v468 = vunpack.c.l.b16 %v449
  %v469 = vunpack.c.l.b16 %v450
  %v470 = vunpack.c.l.b16 %v451
  %v471 = vunpack.c.l.b16 %v452
  %v472 = vpack.c.b16 %v465, %v464
  %v473 = vpack.c.b16 %v467, %v466
  %v474 = vpack.c.b16 %v469, %v468
  %v475 = vpack.c.b16 %v471, %v470
  %v478 = vunpack.c.l.b16 %v454
  %v479 = vunpack.c.l.b16 %v455
  %v480 = vpack.c.b16 %v479, %v478
  %v482 = vsel %vm62, %v472, 0
  %v485 = vsel %vm62, %v473, 0
  %v488 = vsel %vm62, %v474, 0
  %v491 = vsel %vm62, %v475, 0
  %v494 = vsel %vm75, %v480, 0
  %496 = vmatpush.bf16.msra.mxu0 0
  %497 = vmatpush.bf16.msra.mxu0 0
  %498 = vmatpush.bf16.msra.mxu0 0
  %499 = vmatpush.bf16.msra.mxu0 0
  %500 = vmatpush.bf16.msra.mxu0 0
  %501 = vmatpush.bf16.msra.mxu0 0
  %502 = vmatpush.bf16.msra.mxu0 0
  %503 = vmatpush.bf16.msra.mxu0 %v494
  %504 = vmatmul.bf16.gmra.mxu0 %v482
  %v505 = vpop.f32.mrf.mxu0
  %v506 = vadd.f32 0.0, %v505
  %v507 = vpop.f32.mrf.mxu0
  %v508 = vadd.f32 0.0, %v507
  %509 = vmatmul.bf16.gmra.mxu0 %v485
  %v510 = vpop.f32.mrf.mxu0
  %v511 = vadd.f32 0.0, %v510
  %v512 = vpop.f32.mrf.mxu0
  %v513 = vadd.f32 0.0, %v512
  %514 = vmatmul.bf16.gmra.mxu0 %v488
  %v515 = vpop.f32.mrf.mxu0
  %v516 = vadd.f32 0.0, %v515
  %v517 = vpop.f32.mrf.mxu0
  %v518 = vadd.f32 0.0, %v517
  %519 = vmatmul.bf16.gmra.mxu0 %v491
  %v520 = vpop.f32.mrf.mxu0
  %v521 = vadd.f32 0.0, %v520
  %v522 = vpop.f32.mrf.mxu0
  %v523 = vadd.f32 0.0, %v522
  %524 = vdwg.mxu0
  %v525 = vadd.f32 %v436, %v506
  %v526 = vadd.f32 %v437, %v508
  %v527 = vadd.f32 %v438, %v511
  %v528 = vadd.f32 %v439, %v513
  %v529 = vadd.f32 %v440, %v516
  %v530 = vadd.f32 %v441, %v518
  %v531 = vadd.f32 %v442, %v521
  %v532 = vadd.f32 %v443, %v523
  %s533 = scalar_lea.vmem %s0, 192
  %v534 = vld [vmem:[%s533] sm:$0xf]
  %v535 = vld [vmem:[%s533 + $0x4] sm:$0xf]
  %v536 = vld [vmem:[%s533 + $0x8] sm:$0xf]
  %v537 = vld [vmem:[%s533 + $0xc] sm:$0xf]
  %v538 = vld [vmem:[%s533 + $0x10] sm:$0xf]
  %v539 = vld [vmem:[%s533 + $0x14] sm:$0xf]
  %v540 = vld [vmem:[%s533 + $0x18] sm:$0xf]
  %v541 = vld [vmem:[%s533 + $0x1c] sm:$0xf]
  %s542 = scalar_lea.vmem %s1, 48
  %v543 = vld [vmem:[%s542] sm:$0xf]
  %v544 = vld [vmem:[%s542 + $0x4] sm:$0x3]
  %v553 = vunpack.c.l.b16 %v534
  %v554 = vunpack.c.l.b16 %v535
  %v555 = vunpack.c.l.b16 %v536
  %v556 = vunpack.c.l.b16 %v537
  %v557 = vunpack.c.l.b16 %v538
  %v558 = vunpack.c.l.b16 %v539
  %v559 = vunpack.c.l.b16 %v540
  %v560 = vunpack.c.l.b16 %v541
  %v561 = vpack.c.b16 %v554, %v553
  %v562 = vpack.c.b16 %v556, %v555
  %v563 = vpack.c.b16 %v558, %v557
  %v564 = vpack.c.b16 %v560, %v559
  %v567 = vunpack.c.l.b16 %v543
  %v568 = vunpack.c.l.b16 %v544
  %v569 = vpack.c.b16 %v568, %v567
  %v571 = vsel %vm62, %v561, 0
  %v574 = vsel %vm62, %v562, 0
  %v577 = vsel %vm62, %v563, 0
  %v580 = vsel %vm62, %v564, 0
  %v583 = vsel %vm75, %v569, 0
  %585 = vmatpush.bf16.msra.mxu0 0
  %586 = vmatpush.bf16.msra.mxu0 0
  %587 = vmatpush.bf16.msra.mxu0 0
  %588 = vmatpush.bf16.msra.mxu0 0
  %589 = vmatpush.bf16.msra.mxu0 0
  %590 = vmatpush.bf16.msra.mxu0 0
  %591 = vmatpush.bf16.msra.mxu0 0
  %592 = vmatpush.bf16.msra.mxu0 %v583
  %593 = vmatmul.bf16.gmra.mxu0 %v571
  %v594 = vpop.f32.mrf.mxu0
  %v595 = vadd.f32 0.0, %v594
  %v596 = vpop.f32.mrf.mxu0
  %v597 = vadd.f32 0.0, %v596
  %598 = vmatmul.bf16.gmra.mxu0 %v574
  %v599 = vpop.f32.mrf.mxu0
  %v600 = vadd.f32 0.0, %v599
  %v601 = vpop.f32.mrf.mxu0
  %v602 = vadd.f32 0.0, %v601
  %603 = vmatmul.bf16.gmra.mxu0 %v577
  %v604 = vpop.f32.mrf.mxu0
  %v605 = vadd.f32 0.0, %v604
  %v606 = vpop.f32.mrf.mxu0
  %v607 = vadd.f32 0.0, %v606
  %608 = vmatmul.bf16.gmra.mxu0 %v580
  %v609 = vpop.f32.mrf.mxu0
  %v610 = vadd.f32 0.0, %v609
  %v611 = vpop.f32.mrf.mxu0
  %v612 = vadd.f32 0.0, %v611
  %613 = vdwg.mxu0
  %v614 = vadd.f32 %v525, %v595
  %v615 = vadd.f32 %v526, %v597
  %v616 = vadd.f32 %v527, %v600
  %v617 = vadd.f32 %v528, %v602
  %v618 = vadd.f32 %v529, %v605
  %v619 = vadd.f32 %v530, %v607
  %v620 = vadd.f32 %v531, %v610
  %v621 = vadd.f32 %v532, %v612
  %s622 = scalar_lea.vmem %s0, 224
  %v623 = vld [vmem:[%s622] sm:$0xf]
  %v624 = vld [vmem:[%s622 + $0x4] sm:$0xf]
  %v625 = vld [vmem:[%s622 + $0x8] sm:$0xf]
  %v626 = vld [vmem:[%s622 + $0xc] sm:$0xf]
  %v627 = vld [vmem:[%s622 + $0x10] sm:$0xf]
  %v628 = vld [vmem:[%s622 + $0x14] sm:$0xf]
  %v629 = vld [vmem:[%s622 + $0x18] sm:$0xf]
  %v630 = vld [vmem:[%s622 + $0x1c] sm:$0xf]
  %s631 = scalar_lea.vmem %s1, 56
  %v632 = vld [vmem:[%s631] sm:$0xf]
  %v633 = vld [vmem:[%s631 + $0x4] sm:$0x3]
  %v642 = vunpack.c.l.b16 %v623
  %v643 = vunpack.c.l.b16 %v624
  %v644 = vunpack.c.l.b16 %v625
  %v645 = vunpack.c.l.b16 %v626
  %v646 = vunpack.c.l.b16 %v627
  %v647 = vunpack.c.l.b16 %v628
  %v648 = vunpack.c.l.b16 %v629
  %v649 = vunpack.c.l.b16 %v630
  %v650 = vpack.c.b16 %v643, %v642
  %v651 = vpack.c.b16 %v645, %v644
  %v652 = vpack.c.b16 %v647, %v646
  %v653 = vpack.c.b16 %v649, %v648
  %v656 = vunpack.c.l.b16 %v632
  %v657 = vunpack.c.l.b16 %v633
  %v658 = vpack.c.b16 %v657, %v656
  %v660 = vsel %vm62, %v650, 0
  %v663 = vsel %vm62, %v651, 0
  %v666 = vsel %vm62, %v652, 0
  %v669 = vsel %vm62, %v653, 0
  %v672 = vsel %vm75, %v658, 0
  %674 = vmatpush.bf16.msra.mxu0 0
  %675 = vmatpush.bf16.msra.mxu0 0
  %676 = vmatpush.bf16.msra.mxu0 0
  %677 = vmatpush.bf16.msra.mxu0 0
  %678 = vmatpush.bf16.msra.mxu0 0
  %679 = vmatpush.bf16.msra.mxu0 0
  %680 = vmatpush.bf16.msra.mxu0 0
  %681 = vmatpush.bf16.msra.mxu0 %v672
  %682 = vmatmul.bf16.gmra.mxu0 %v660
  %v683 = vpop.f32.mrf.mxu0
  %v684 = vadd.f32 0.0, %v683
  %v685 = vpop.f32.mrf.mxu0
  %v686 = vadd.f32 0.0, %v685
  %687 = vmatmul.bf16.gmra.mxu0 %v663
  %v688 = vpop.f32.mrf.mxu0
  %v689 = vadd.f32 0.0, %v688
  %v690 = vpop.f32.mrf.mxu0
  %v691 = vadd.f32 0.0, %v690
  %692 = vmatmul.bf16.gmra.mxu0 %v666
  %v693 = vpop.f32.mrf.mxu0
  %v694 = vadd.f32 0.0, %v693
  %v695 = vpop.f32.mrf.mxu0
  %v696 = vadd.f32 0.0, %v695
  %697 = vmatmul.bf16.gmra.mxu0 %v669
  %v698 = vpop.f32.mrf.mxu0
  %v699 = vadd.f32 0.0, %v698
  %v700 = vpop.f32.mrf.mxu0
  %v701 = vadd.f32 0.0, %v700
  %702 = vdwg.mxu0
  %v703 = vadd.f32 %v614, %v684
  %v704 = vadd.f32 %v615, %v686
  %v705 = vadd.f32 %v616, %v689
  %v706 = vadd.f32 %v617, %v691
  %v707 = vadd.f32 %v618, %v694
  %v708 = vadd.f32 %v619, %v696
  %v709 = vadd.f32 %v620, %v699
  %v710 = vadd.f32 %v621, %v701
  %s711 = scalar_lea.vmem %s0, 256
  %v712 = vld [vmem:[%s711] sm:$0xf]
  %v713 = vld [vmem:[%s711 + $0x4] sm:$0xf]
  %v714 = vld [vmem:[%s711 + $0x8] sm:$0xf]
  %v715 = vld [vmem:[%s711 + $0xc] sm:$0xf]
  %v716 = vld [vmem:[%s711 + $0x10] sm:$0xf]
  %v717 = vld [vmem:[%s711 + $0x14] sm:$0xf]
  %v718 = vld [vmem:[%s711 + $0x18] sm:$0xf]
  %v719 = vld [vmem:[%s711 + $0x1c] sm:$0xf]
  %s720 = scalar_lea.vmem %s1, 64
  %v721 = vld [vmem:[%s720] sm:$0xf]
  %v722 = vld [vmem:[%s720 + $0x4] sm:$0x3]
  %v731 = vunpack.c.l.b16 %v712
  %v732 = vunpack.c.l.b16 %v713
  %v733 = vunpack.c.l.b16 %v714
  %v734 = vunpack.c.l.b16 %v715
  %v735 = vunpack.c.l.b16 %v716
  %v736 = vunpack.c.l.b16 %v717
  %v737 = vunpack.c.l.b16 %v718
  %v738 = vunpack.c.l.b16 %v719
  %v739 = vpack.c.b16 %v732, %v731
  %v740 = vpack.c.b16 %v734, %v733
  %v741 = vpack.c.b16 %v736, %v735
  %v742 = vpack.c.b16 %v738, %v737
  %v745 = vunpack.c.l.b16 %v721
  %v746 = vunpack.c.l.b16 %v722
  %v747 = vpack.c.b16 %v746, %v745
  %v749 = vsel %vm62, %v739, 0
  %v752 = vsel %vm62, %v740, 0
  %v755 = vsel %vm62, %v741, 0
  %v758 = vsel %vm62, %v742, 0
  %v761 = vsel %vm75, %v747, 0
  %763 = vmatpush.bf16.msra.mxu0 0
  %764 = vmatpush.bf16.msra.mxu0 0
  %765 = vmatpush.bf16.msra.mxu0 0
  %766 = vmatpush.bf16.msra.mxu0 0
  %767 = vmatpush.bf16.msra.mxu0 0
  %768 = vmatpush.bf16.msra.mxu0 0
  %769 = vmatpush.bf16.msra.mxu0 0
  %770 = vmatpush.bf16.msra.mxu0 %v761
  %771 = vmatmul.bf16.gmra.mxu0 %v749
  %v772 = vpop.f32.mrf.mxu0
  %v773 = vadd.f32 0.0, %v772
  %v774 = vpop.f32.mrf.mxu0
  %v775 = vadd.f32 0.0, %v774
  %776 = vmatmul.bf16.gmra.mxu0 %v752
  %v777 = vpop.f32.mrf.mxu0
  %v778 = vadd.f32 0.0, %v777
  %v779 = vpop.f32.mrf.mxu0
  %v780 = vadd.f32 0.0, %v779
  %781 = vmatmul.bf16.gmra.mxu0 %v755
  %v782 = vpop.f32.mrf.mxu0
  %v783 = vadd.f32 0.0, %v782
  %v784 = vpop.f32.mrf.mxu0
  %v785 = vadd.f32 0.0, %v784
  %786 = vmatmul.bf16.gmra.mxu0 %v758
  %v787 = vpop.f32.mrf.mxu0
  %v788 = vadd.f32 0.0, %v787
  %v789 = vpop.f32.mrf.mxu0
  %v790 = vadd.f32 0.0, %v789
  %791 = vdwg.mxu0
  %v792 = vadd.f32 %v703, %v773
  %v793 = vadd.f32 %v704, %v775
  %v794 = vadd.f32 %v705, %v778
  %v795 = vadd.f32 %v706, %v780
  %v796 = vadd.f32 %v707, %v783
  %v797 = vadd.f32 %v708, %v785
  %v798 = vadd.f32 %v709, %v788
  %v799 = vadd.f32 %v710, %v790
  %v800 = vld [vmem:[%s2] sm:$0x1]
  %v802 = vperm.slane %v800, 0
  %v804 = vadd.f32 %v792, %v802
  %v805 = vadd.f32 %v793, %v802
  %v806 = vadd.f32 %v794, %v802
  %v807 = vadd.f32 %v795, %v802
  %v808 = vadd.f32 %v796, %v802
  %v809 = vadd.f32 %v797, %v802
  %v810 = vadd.f32 %v798, %v802
  %v811 = vadd.f32 %v799, %v802
  %vm812 = vcmask 392192
  %813 = vst.msk [vmem:[%s3] sm:$0xff] %vm812, %v804
  %814 = vst.msk [vmem:[%s3 + $0x8] sm:$0xff] %vm812, %v805
  %815 = vst.msk [vmem:[%s3 + $0x10] sm:$0xff] %vm812, %v806
  %816 = vst.msk [vmem:[%s3 + $0x18] sm:$0xff] %vm812, %v807
  %817 = vst.msk [vmem:[%s3 + $0x20] sm:$0xff] %vm812, %v808
  %818 = vst.msk [vmem:[%s3 + $0x28] sm:$0xff] %vm812, %v809
  %819 = vst.msk [vmem:[%s3 + $0x30] sm:$0xff] %vm812, %v810
  %820 = vst.msk [vmem:[%s3 + $0x38] sm:$0xff] %vm812, %v811
  // Predicated region
  $region14: #{tpu_custom_call.1} parent=0 // pred_check
    _
  $region15: #{tpu_custom_call.1} parent=0 // pred_check_branch
    %822 = sbr.rel (0) target = $region17
  $region16: #{tpu_custom_call.1} parent=0 // pred_region
    _
  $region17: #{tpu_custom_call.1} parent=0 // pred_fallthru
    _
  // Predicated region
  $region18: #{tpu_custom_call.1} parent=0 // pred_check
    _
  $region19: #{tpu_custom_call.1} parent=0 // pred_check_branch
    %824 = sbr.rel (0) target = $region21
  $region20: #{tpu_custom_call.1} parent=0 // pred_region
    _
  $region21: #{tpu_custom_call.1} parent=0 // pred_fallthru
    _

</llo_original>
